<compile_context>
chip_gen: v5e
topology: v5e:2x2
jax: 0.10.0
libtpu: 0.0.40
codegen_flags: <defaults>
</compile_context>

<pallas_src>
import functools
import math

import jax
import jax.numpy as jnp
from jax.experimental import pallas as pl
from jax.experimental.pallas import tpu as pltpu


def _time_slice(start, size, stride):
    """Sublane slice of `size` rows starting at `start`, step `stride`."""
    if stride == 1:
        return pl.ds(start, size)
    return pl.ds(start, size, stride=stride)


def _row_conv_kernel(*refs, kw, t_in, t_out, stride, padding, has_bias):
    # refs: x_ref (T, LANE), w_ref (num_tiles*kW, LANE) resident,
    #       [b_ref (num_tiles, LANE) resident], o_ref (t_out, LANE)
    if has_bias:
        x_ref, w_ref, b_ref, o_ref = refs
    else:
        x_ref, w_ref, o_ref = refs
        b_ref = None

    j = pl.program_id(0)                     # lane-tile index (weights resident)
    lane = o_ref.shape[1]

    if has_bias:
        acc = jnp.broadcast_to(
            b_ref[pl.ds(j, 1), :].astype(jnp.float32), (t_out, lane))
    else:
        acc = None                           # first tap initializes the acc

    w_base = j * kw
    for k in range(kw):                      # small static unroll over taps
        s = k - padding                      # input row feeding output row 0
        # valid output rows t: 0 <= t*stride + s <= t_in - 1  (all static)
        t_lo = max(0, -(s // stride))
        t_hi = min(t_out - 1, (t_in - 1 - s) // stride)
        n_k = t_hi - t_lo + 1
        if n_k <= 0:
            continue
        src = t_lo * stride + s
        w_row = w_ref[pl.ds(w_base + k, 1), :].astype(jnp.float32)   # (1, lane)
        x_k = x_ref[_time_slice(src, n_k, stride), :].astype(jnp.float32)
        contrib = x_k * w_row
        if n_k != t_out:
            # tap only touches output rows [t_lo, t_lo+n_k); zero-fill the halo
            parts = []
            if t_lo:
                parts.append(jnp.zeros((t_lo, lane), jnp.float32))
            parts.append(contrib)
            tail = t_out - t_lo - n_k
            if tail:
                parts.append(jnp.zeros((tail, lane), jnp.float32))
            contrib = jnp.concatenate(parts, axis=0)
        acc = contrib if acc is None else acc + contrib

    if acc is None:                          # degenerate: no valid taps
        acc = jnp.zeros((t_out, lane), jnp.float32)
    o_ref[...] = acc.astype(o_ref.dtype)     # single store pass per tile


def temporal_row_convolution(x, weight, bias=None, *, stride=1, padding=0,
                             feat_first=False, lane_tile=None,
                             vmem_limit_bytes=None):
    """Depthwise temporal ("row") convolution, forward pass.

    x      : (T, N, H) if feat_first=False, else (N, H, T)
    weight : (H, 1, kW) or (H, kW)
    bias   : (H,) or None
    returns: (T_out, N, H) or (N, H, T_out),
             T_out = (T + 2*padding - kW)//stride + 1
    """
    if stride < 1:
        raise ValueError("stride must be >= 1")
    # TODO(synk): feat_first inputs still pay a transpose pass each way; a
    # time-on-lanes kernel variant would operate on (N, H, T) directly.
    x_tnh = jnp.transpose(x, (2, 0, 1)) if feat_first else x
    T, N, H = x_tnh.shape
    w = weight.reshape(H, -1)                        # (H, kW)
    kW = w.shape[1]
    has_bias = bias is not None

    t_out = (T + 2 * padding - kW) // stride + 1
    if t_out < 1:
        raise ValueError("kernel_size wider than padded sequence")
    nh = N * H
    itemsize = jnp.dtype(x.dtype).itemsize
    w_itemsize = jnp.dtype(weight.dtype).itemsize

    # ---- lane-dense 2-D layout: lane index = n*H + h (free reshape) ----
    x2d = x_tnh.reshape(T, nh)
    w_lane = jnp.tile(w.T, (1, N))                   # (kW, N*H): col n*H+h -> w[h,k]

    # ---- generation-aware VMEM budget (v5e/v6e 128 MiB, v7x 64 MiB) ----
    try:
        vmem_cap = int(pltpu.get_tpu_info().vmem_capacity_bytes)
    except Exception:
        vmem_cap = 64 * 1024 * 1024
    if vmem_limit_bytes is None:
        vmem_limit_bytes = min(vmem_cap * 3 // 4, vmem_cap - (4 << 20))

    def per_step_bytes(lane):
        # double-buffered x/out blocks + f32 accumulator & one tap temporary
        return (2 * (T + t_out) * itemsize + 3 * t_out * 4) * lane

    def resident_bytes(lane):
        nh_p = pl.cdiv(nh, lane) * lane
        r = kW * nh_p * w_itemsize
        if has_bias:
            r += nh_p * w_itemsize
        return r

    nh128 = pl.cdiv(nh, 128) * 128
    budget = vmem_limit_bytes - (2 << 20)            # headroom for Mosaic scratch
    if lane_tile is None:
        lane_tile = 128
        for cand in (8192, 4096, 2048, 1024, 512, 256, 128):
            if per_step_bytes(cand) + resident_bytes(cand) <= budget:
                lane_tile = cand
                break
        # keep >= 2 grid steps: feeds both v7x TensorCores and lets the
        # BlockSpec pipeline overlap DMA with compute.
        if nh128 >= 256:
            lane_tile = min(lane_tile, max(128, ((nh128 // 2) // 128) * 128))
    lane_tile = max(128, (int(lane_tile) // 128) * 128)
    lane_tile = min(lane_tile, nh128)

    nh_pad = pl.cdiv(nh, lane_tile) * lane_tile
    num_tiles = nh_pad // lane_tile

    # If even the smallest tile overflows the default budget (very long T),
    # raise the scoped-VMEM limit instead of failing at compile time.
    need = per_step_bytes(lane_tile) + resident_bytes(lane_tile) + (2 << 20)
    if need > vmem_limit_bytes:
        vmem_limit_bytes = min(vmem_cap * 95 // 100, need)
    # TODO(synk): sequences long enough to overflow even that need a time-tiled
    # grid axis with overlapping (halo) input windows.

    if nh_pad != nh:
        x2d = jnp.pad(x2d, ((0, 0), (0, nh_pad - nh)))
        w_lane = jnp.pad(w_lane, ((0, 0), (0, nh_pad - nh)))

    # VMEM-resident per-lane weights: row j*kW + k holds tap k of lane tile j.
    w_r = (w_lane.reshape(kW, num_tiles, lane_tile)
           .transpose(1, 0, 2).reshape(num_tiles * kW, lane_tile))

    inputs = [x2d, w_r]
    in_specs = [
        pl.BlockSpec((T, lane_tile), lambda j: (0, j)),
        pl.BlockSpec((num_tiles * kW, lane_tile), lambda j: (0, 0)),   # resident
    ]
    b_r = None
    if has_bias:
        b_lane = jnp.tile(bias.reshape(1, H), (1, N))                  # (1, N*H)
        if nh_pad != nh:
            b_lane = jnp.pad(b_lane, ((0, 0), (0, nh_pad - nh)))
        b_r = b_lane.reshape(num_tiles, lane_tile)
        inputs.append(b_r)
        in_specs.append(pl.BlockSpec((num_tiles, lane_tile), lambda j: (0, 0)))

    kernel = functools.partial(
        _row_conv_kernel, kw=kW, t_in=T, t_out=t_out, stride=stride,
        padding=padding, has_bias=has_bias)

    out2d = pl.pallas_call(
        kernel,
        out_shape=jax.ShapeDtypeStruct((t_out, nh_pad), x.dtype),
        grid=(num_tiles,),
        in_specs=in_specs,
        out_specs=pl.BlockSpec((t_out, lane_tile), lambda j: (0, j)),
        compiler_params=pltpu.CompilerParams(
            dimension_semantics=("parallel",),   # lane tiles independent
            vmem_limit_bytes=int(vmem_limit_bytes),
        ),
        cost_estimate=pl.CostEstimate(
            flops=2 * t_out * nh_pad * kW,
            transcendentals=0,
            bytes_accessed=(x2d.size * itemsize + w_r.size * w_itemsize
                            + (b_r.size * w_itemsize if has_bias else 0)
                            + t_out * nh_pad * itemsize),
        ),
    )(*inputs)

    out2d = out2d[:, :nh]
    out = out2d.reshape(t_out, N, H)
    return jnp.transpose(out, (1, 2, 0)) if feat_first else out


def _row_conv_ref(x, weight, bias, stride, padding, feat_first):
    """Pure-JAX reference with identical semantics."""
    x_tnh = jnp.transpose(x, (2, 0, 1)) if feat_first else x
    T, N, H = x_tnh.shape
    w = weight.reshape(H, -1)
    kW = w.shape[1]
    xp = jnp.pad(x_tnh.astype(jnp.float32), ((padding, padding), (0, 0), (0, 0)))
    t_out = (T + 2 * padding - kW) // stride + 1
    out = jnp.zeros((t_out, N, H), jnp.float32)
    for k in range(kW):
        sl = xp[k: k + (t_out - 1) * stride + 1: stride]
        out = out + sl * w[:, k].astype(jnp.float32)
    if bias is not None:
        out = out + bias.astype(jnp.float32)
    out = out.astype(x.dtype)
    return jnp.transpose(out, (1, 2, 0)) if feat_first else out


if __name__ == "__main__":
    key = jax.random.PRNGKey(0)

    def init_params(k, H, kW, use_bias):
        kw_, kb_ = jax.random.split(k)
        stdv = 1.0 / math.sqrt(kW * H)
        weight = jax.random.uniform(kw_, (H, 1, kW), minval=-stdv, maxval=stdv,
                                    dtype=jnp.float32)
        bias = (jax.random.uniform(kb_, (H,), minval=-stdv, maxval=stdv,
                                   dtype=jnp.float32) if use_bias else None)
        return weight, bias

    # Case 1: module defaults (bias=False, feat_first=False), tiny shapes.
    T, N, H, kW = 8, 2, 32, 3
    k1, k2, key = jax.random.split(key, 3)
    x = jax.random.normal(k1, (T, N, H), dtype=jnp.float32)
    weight, bias = init_params(k2, H, kW, use_bias=False)
    y = temporal_row_convolution(x, weight, bias, stride=1, padding=0)
    jax.block_until_ready(y)
    y_ref = _row_conv_ref(x, weight, bias, 1, 0, False)
    assert y.shape == (T - kW + 1, N, H)
    assert jnp.allclose(y, y_ref, atol=1e-5, rtol=1e-5)

    # Case 2: padding + bias, forced lane_tile=128 to exercise the multi-step
    # pipelined grid (N*H = 1024 -> 8 lane tiles) and the in-kernel halo taps.
    T, N, H, kW = 48, 4, 256, 5
    k1, k2, key = jax.random.split(key, 3)
    x = jax.random.normal(k1, (T, N, H), dtype=jnp.float32)
    weight, bias = init_params(k2, H, kW, use_bias=True)
    y = temporal_row_convolution(x, weight, bias, stride=1, padding=2, lane_tile=128)
    jax.block_until_ready(y)
    y_ref = _row_conv_ref(x, weight, bias, 1, 2, False)
    assert y.shape == (T + 4 - kW + 1, N, H)
    assert jnp.allclose(y, y_ref, atol=1e-5, rtol=1e-5)

    # Case 3: feat_first layout, stride=2 folded into the kernel, padding=1.
    T, N, H, kW = 20, 2, 64, 3
    k1, k2, key = jax.random.split(key, 3)
    x_nht = jax.random.normal(k1, (N, H, T), dtype=jnp.float32)
    weight, bias = init_params(k2, H, kW, use_bias=False)
    y = temporal_row_convolution(x_nht, weight, bias, stride=2, padding=1,
                                 feat_first=True)
    jax.block_until_ready(y)
    y_ref = _row_conv_ref(x_nht, weight, bias, 2, 1, True)
    t_out = (T + 2 * 1 - kW) // 2 + 1
    assert y.shape == (N, H, t_out)
    assert jnp.allclose(y, y_ref, atol=1e-5, rtol=1e-5)

    print("KERNEL_OK")
</pallas_src>

<mosaic_0001>
module attributes {stable_mosaic.version = 11 : i64} {
  func.func @_row_conv_kernel(%arg0: i32, %arg1: memref<8x128xf32, #tpu.memory_space<vmem>>, %arg2: memref<3x128xf32, #tpu.memory_space<vmem>>, %arg3: memref<6x128xf32, #tpu.memory_space<vmem>>) attributes {dimension_semantics = [#tpu.dimension_semantics<parallel>], iteration_bounds = array<i64: 1>, scalar_prefetch = 0 : i64, scratch_operands = 0 : i64, tpu.core_type = #tpu.core_type<tc>, window_params = [{transform_indices = @transform_0, window_bounds = array<i64: 8, 128>}, {pipeline_mode = #tpu.pipeline_mode<synchronous>, transform_indices = @transform_1, window_bounds = array<i64: 3, 128>}, {transform_indices = @transform_2, window_bounds = array<i64: 6, 128>}]} {
    %c3_i32 = arith.constant 3 : i32
    %0 = arith.muli %arg0, %c3_i32 : i32
    %c0_i32 = arith.constant 0 : i32
    %1 = arith.addi %0, %c0_i32 : i32
    %2 = arith.index_cast %1 : i32 to index
    %c0 = arith.constant 0 : index
    %3 = vector.load %arg2[%2, %c0] : memref<3x128xf32, #tpu.memory_space<vmem>>, vector<1x128xf32>
    %c0_0 = arith.constant 0 : index
    %c0_1 = arith.constant 0 : index
    %4 = vector.load %arg1[%c0_0, %c0_1] : memref<8x128xf32, #tpu.memory_space<vmem>>, vector<6x128xf32>
    %5 = vector.broadcast %3 : vector<1x128xf32> to vector<6x128xf32>
    %6 = arith.mulf %4, %5 : vector<6x128xf32>
    %c1_i32 = arith.constant 1 : i32
    %7 = arith.addi %0, %c1_i32 : i32
    %8 = arith.index_cast %7 : i32 to index
    %c0_2 = arith.constant 0 : index
    %9 = vector.load %arg2[%8, %c0_2] : memref<3x128xf32, #tpu.memory_space<vmem>>, vector<1x128xf32>
    %c1 = arith.constant 1 : index
    %c0_3 = arith.constant 0 : index
    %10 = vector.load %arg1[%c1, %c0_3] : memref<8x128xf32, #tpu.memory_space<vmem>>, vector<6x128xf32>
    %11 = vector.broadcast %9 : vector<1x128xf32> to vector<6x128xf32>
    %12 = arith.mulf %10, %11 : vector<6x128xf32>
    %13 = arith.addf %6, %12 : vector<6x128xf32>
    %c2_i32 = arith.constant 2 : i32
    %14 = arith.addi %0, %c2_i32 : i32
    %15 = arith.index_cast %14 : i32 to index
    %c0_4 = arith.constant 0 : index
    %16 = vector.load %arg2[%15, %c0_4] : memref<3x128xf32, #tpu.memory_space<vmem>>, vector<1x128xf32>
    %c2 = arith.constant 2 : index
    %c0_5 = arith.constant 0 : index
    %17 = vector.load %arg1[%c2, %c0_5] : memref<8x128xf32, #tpu.memory_space<vmem>>, vector<6x128xf32>
    %18 = vector.broadcast %16 : vector<1x128xf32> to vector<6x128xf32>
    %19 = arith.mulf %17, %18 : vector<6x128xf32>
    %20 = arith.addf %13, %19 : vector<6x128xf32>
    %c0_6 = arith.constant 0 : index
    %c0_7 = arith.constant 0 : index
    %21 = vector.load %arg3[%c0_6, %c0_7] : memref<6x128xf32, #tpu.memory_space<vmem>>, vector<6x128xf32>
    tpu.vector_store %arg3[%c0_6, %c0_7], %20 {strides = array<i32>} : memref<6x128xf32, #tpu.memory_space<vmem>>, vector<6x128xf32>,
    return
  }
  func.func @transform_0(%arg0: i32) -> (i32, i32) {
    %c0_i32 = arith.constant 0 : i32
    %c0_i32_0 = arith.constant 0 : i32
    return %c0_i32, %arg0 : i32, i32
  }
  func.func @transform_1(%arg0: i32) -> (i32, i32) {
    %c0_i32 = arith.constant 0 : i32
    %c0_i32_0 = arith.constant 0 : i32
    %c0_i32_1 = arith.constant 0 : i32
    return %c0_i32, %c0_i32_0 : i32, i32
  }
  func.func @transform_2(%arg0: i32) -> (i32, i32) {
    %c0_i32 = arith.constant 0 : i32
    %c0_i32_0 = arith.constant 0 : i32
    return %c0_i32, %arg0 : i32, i32
  }
}

</mosaic_0001>

<llo_original>
// kernel: tpu_custom_call.1
$region0: #{tpu_custom_call.1}
  #allocation0 [shape = 'u32[]', space=smem, size = 0x4, offset = 0x4, fixed_abs, tag = 'smem constant byte address 0x4 - core index']
  #allocation1 [shape = 'u32[72,128]{1,0:T(1,128)}', space=vmem, size = 0x9000, scoped, tag = 'internal scratch']
  %s0 = inlined_call_operand.hbm [shape: f32[8,128], index: 0, kind: input, shape index: {}]
  %s1 = inlined_call_operand.hbm [shape: f32[3,128], index: 1, kind: input, shape index: {}]
  %s2 = inlined_call_operand.hbm [shape: f32[6,128], index: 2, kind: output, shape index: {}]
  %s3 = sld [smem:[#allocation0]]
  $region26: #{tpu_custom_call.1} parent=0
    _
  %s5 = ssub.s32 1, %s3
  %s6 = scalar_select 0, %s5, %s3
  $region1: #{tpu_custom_call.1} parent=0
    #allocation2 [shape = 'u8[4096]{0}', space=vmem, size = 0x1000, scoped, tag = 'input window, operand 0, single buffered']
    #allocation3 [shape = 's32[1]{0}', space=sflag, size = 0x4, scoped, tag = 'scoped memory for tpu_custom_call.1']
    #allocation4 [shape = 's32[1]{0}', space=sflag, size = 0x4, scoped, tag = 'scoped memory for tpu_custom_call.1']
    #allocation5 [shape = 'u8[2048]{0}', space=vmem, size = 0x800, scoped, tag = 'input window, operand 1, single buffered']
    #allocation6 [shape = 's32[1]{0}', space=sflag, size = 0x4, scoped, tag = 'scoped memory for tpu_custom_call.1']
    #allocation7 [shape = 'u8[4096]{0}', space=vmem, size = 0x1000, scoped, tag = 'output window, operand 0, single buffered']
    %7 = vsyncpa [#allocation3], 0
    %8 = vsyncpa [#allocation6], 0
    %9 = vsyncpa [#allocation4], 0
    // Predicated region
    $region2: #{tpu_custom_call.1} parent=1 // pred_check
      _
    $region3: #{tpu_custom_call.1} parent=1 // pred_check_branch
      %11 = sbr.rel (0) target = $region5
    $region4: #{tpu_custom_call.1} parent=1 // pred_region
      %13 = vsyncadd [#allocation3], 0
      %s15 = sshll.u32 %s0, 4
      %s16 = int_to_ptr.hbm [resolvable:$true] %s15
      %s17 = sshll.u32 [#allocation2], 4
      %s18 = int_to_ptr.vmem [resolvable:$true] %s17
      %20 = dma.hbm_to_vmem [thread:$0]  %s16, 128, %s18, [#allocation3]
    $region5: #{tpu_custom_call.1} parent=1 // pred_fallthru
      _
    // Predicated region
    $region6: #{tpu_custom_call.1} parent=1 // pred_check
      _
    $region7: #{tpu_custom_call.1} parent=1 // pred_check_branch
      %22 = sbr.rel (0) target = $region9
    $region8: #{tpu_custom_call.1} parent=1 // pred_region
      %24 = vsyncadd [#allocation6], 0
      %s26 = sshll.u32 %s1, 4
      %s27 = int_to_ptr.hbm [resolvable:$true] %s26
      %s28 = sshll.u32 [#allocation5], 4
      %s29 = int_to_ptr.vmem [resolvable:$true] %s28
      %31 = dma.hbm_to_vmem [thread:$0]  %s27, 64, %s29, [#allocation6]
    $region9: #{tpu_custom_call.1} parent=1 // pred_fallthru
      _
    // Predicated region
    $region10: #{tpu_custom_call.1} parent=1 // pred_check
      _
    $region11: #{tpu_custom_call.1} parent=1 // pred_check_branch
      %33 = sbr.rel (0) target = $region13
    $region12: #{tpu_custom_call.1} parent=1 // pred_region
      %35 = dma.done [#allocation3], 128
    $region13: #{tpu_custom_call.1} parent=1 // pred_fallthru
      _
    // Predicated region
    $region14: #{tpu_custom_call.1} parent=1 // pred_check
      _
    $region15: #{tpu_custom_call.1} parent=1 // pred_check_branch
      %37 = sbr.rel (0) target = $region17
    $region16: #{tpu_custom_call.1} parent=1 // pred_region
      %39 = dma.done [#allocation6], 64
    $region17: #{tpu_custom_call.1} parent=1 // pred_fallthru
      _
    %s40 = smul.u32 0, 3
    %s41 = scalar_lea.vmem [#allocation5], %s40
    %v42 = vld [vmem:[%s41] sm:$0x1]
    %v43 = vld [vmem:[#allocation2] sm:$0x3f]
    %v44 = vperm.slane %v42, 0
    %v45 = vmul.f32 %v43, %v44
    %s46 = sadd.s32 %s40, 1
    %s47 = scalar_lea.vmem [#allocation5], %s46
    %v48 = vld [vmem:[%s47] sm:$0x1]
    %v49 = vld [vmem:[#allocation2 + $0x1] sm:$0x3f]
    %v50 = vperm.slane %v48, 0
    %v51 = vmul.f32 %v49, %v50
    %v52 = vadd.f32 %v45, %v51
    %s53 = sadd.s32 %s40, 2
    %s54 = scalar_lea.vmem [#allocation5], %s53
    %v55 = vld [vmem:[%s54] sm:$0x1]
    %v56 = vld [vmem:[#allocation2 + $0x2] sm:$0x3f]
    %v57 = vperm.slane %v55, 0
    %v58 = vmul.f32 %v56, %v57
    %v59 = vadd.f32 %v52, %v58
    %60 = vst [vmem:[#allocation7] sm:$0x3f] %v59
    // Predicated region
    $region18: #{tpu_custom_call.1} parent=1 // pred_check
      _
    $region19: #{tpu_custom_call.1} parent=1 // pred_check_branch
      %62 = sbr.rel (0) target = $region21
    $region20: #{tpu_custom_call.1} parent=1 // pred_region
      %64 = vsyncadd [#allocation4], 0
      %s66 = sshll.u32 [#allocation7], 4
      %s67 = int_to_ptr.vmem [resolvable:$true] %s66
      %s68 = sshll.u32 %s2, 4
      %s69 = int_to_ptr.hbm [resolvable:$true] %s68
      %71 = dma.vmem_to_hbm [thread:$0]  %s67, 128, %s69, [#allocation4]
    $region21: #{tpu_custom_call.1} parent=1 // pred_fallthru
      _
    // Predicated region
    $region22: #{tpu_custom_call.1} parent=1 // pred_check
      _
    $region23: #{tpu_custom_call.1} parent=1 // pred_check_branch
      %73 = sbr.rel (0) target = $region25
    $region24: #{tpu_custom_call.1} parent=1 // pred_region
      %75 = dma.done [#allocation4], 128
    $region25: #{tpu_custom_call.1} parent=1 // pred_fallthru
      _
    %76 = vsyncpa [#allocation3], 1
    %77 = vsyncpa [#allocation6], 1
    %78 = vsyncpa [#allocation4], 1

</llo_original>
